<compile_context>
chip_gen: v6e
topology: v6e:2x2x1
jax: 0.10.0
libtpu: 0.0.40
codegen_flags: <defaults>
</compile_context>

<pallas_src>
import functools

import jax
import jax.numpy as jnp
from jax.experimental import pallas as pl
from jax.experimental.pallas import tpu as pltpu


def _round_up(x, m):
    return ((x + m - 1) // m) * m


def _vmem_capacity_bytes():
    """Best-effort per-core VMEM capacity query; conservative fallback."""
    try:
        cap = int(pltpu.get_tpu_info().vmem_capacity_bytes)
        if cap > 0:
            return cap
    except Exception:
        pass
    return 64 * 1024 * 1024  # v7x per-TC size -> safe lower bound everywhere


# ---------------------------------------------------------------------------
# Kernel bodies.
# ---------------------------------------------------------------------------
def _single_k_kernel(z_ref, w_ref, b_ref, o_ref, *, compute_dtype):
    """K fits one block: no scratch, no branches, bias added once per tile."""
    acc = jnp.dot(
        z_ref[...].astype(compute_dtype),
        w_ref[...].astype(compute_dtype),
        preferred_element_type=jnp.float32,
    )
    o_ref[...] = (acc + b_ref[...].astype(jnp.float32)).astype(o_ref.dtype)


def _multi_k_f32_kernel(z_ref, w_ref, b_ref, o_ref, *, compute_dtype):
    """Multi-K, float32 output: accumulate directly into the resident output
    block (output block index is constant along the innermost K axis)."""
    k = pl.program_id(2)

    @pl.when(k == 0)
    def _init():
        o_ref[...] = jnp.broadcast_to(b_ref[...].astype(jnp.float32), o_ref.shape)

    o_ref[...] += jnp.dot(
        z_ref[...].astype(compute_dtype),
        w_ref[...].astype(compute_dtype),
        preferred_element_type=jnp.float32,
    )


def _multi_k_acc_kernel(z_ref, w_ref, b_ref, o_ref, acc_ref, *, compute_dtype):
    """Multi-K, non-f32 output: classic f32 scratch accumulator."""
    k = pl.program_id(2)

    @pl.when(k == 0)
    def _init():
        acc_ref[...] = jnp.zeros_like(acc_ref)

    acc_ref[...] += jnp.dot(
        z_ref[...].astype(compute_dtype),
        w_ref[...].astype(compute_dtype),
        preferred_element_type=jnp.float32,
    )

    @pl.when(k == pl.num_programs(2) - 1)
    def _finalize():
        o_ref[...] = (acc_ref[...] + b_ref[...].astype(jnp.float32)).astype(o_ref.dtype)


# ---------------------------------------------------------------------------
# Wrapper.
# ---------------------------------------------------------------------------
@functools.partial(jax.jit, static_argnames=("compute_dtype", "tm", "tn", "tk"))
def linear_generator_forward(z, W, b, *, compute_dtype=jnp.bfloat16,
                             tm=None, tn=None, tk=None):
    """Compute z @ W + b with a tiled Pallas kernel (MXU matmul + bias).

    compute_dtype: dtype used for the MXU matmul (accumulation is always f32).
    Pass jnp.float32 for bit-faithful PyTorch semantics.
    """
    B, K = z.shape
    Kw, N = W.shape
    assert K == Kw and b.shape == (N,)
    out_dtype = z.dtype

    # --- generation-aware tile defaults ------------------------------------
    cap = _vmem_capacity_bytes()
    big_vmem = cap >= 96 * 1024 * 1024  # v5e/v6e have 128 MiB physical VMEM
    if tm is None:
        tm = 512
    if tn is None:
        tn = 1024
    if tk is None:
        tk = 1024 if big_vmem else 512

    # --- block shapes (no M/N padding; full-extent blocks bypass (8,128)) ---
    SUB = 16  # sublane multiple (safe for both f32 and bf16/packed layouts)
    if B <= max(SUB, 128):
        bm = B                                 # single full-extent M block
    else:
        # >= 2 M blocks so the v7x second TensorCore gets work; cap at tm.
        bm = min(tm, _round_up(-(-B // 2), SUB))

    bn = N if N <= tn else tn                  # full extent or 128/256-aligned

    if K <= tk:
        bk, Kp = K, K                          # single K block -> fast path
    else:
        bk = tk
        Kp = _round_up(K, tk)                  # K MUST be zero-padded (reduction)

    # Only the reduction dimension is ever padded (zeros contribute nothing).
    zp = z if Kp == K else jnp.pad(z, ((0, 0), (0, Kp - K)))
    Wp = W if Kp == K else jnp.pad(W, ((0, Kp - K), (0, 0)))
    b2 = b.reshape(1, N)

    grid = (pl.cdiv(B, bm), pl.cdiv(N, bn), Kp // bk)
    grid_k = grid[2]

    # --- pick kernel variant -------------------------------------------------
    if grid_k == 1:
        kernel = functools.partial(_single_k_kernel, compute_dtype=compute_dtype)
        scratch = []
        acc_bytes = 0
    elif out_dtype == jnp.float32:
        kernel = functools.partial(_multi_k_f32_kernel, compute_dtype=compute_dtype)
        scratch = []
        acc_bytes = 0
    else:
        kernel = functools.partial(_multi_k_acc_kernel, compute_dtype=compute_dtype)
        scratch = [pltpu.VMEM((bm, bn), jnp.float32)]
        acc_bytes = bm * bn * 4

    # --- VMEM budget: double-buffered z/W/b/out tiles (+ optional scratch) ---
    in_sz = z.dtype.itemsize
    out_sz = jnp.dtype(out_dtype).itemsize
    tile_bytes = (2 * (bm * bk + bk * bn) * in_sz
                  + 2 * bn * 4
                  + 2 * bm * bn * out_sz
                  + acc_bytes)
    vmem_limit = int(min(tile_bytes * 3 // 2 + (4 << 20), int(cap * 0.7)))
    vmem_limit = max(vmem_limit, 16 << 20)

    cost = pl.CostEstimate(
        flops=2 * B * K * N,
        transcendentals=0,
        bytes_accessed=int(B * K * in_sz + K * N * W.dtype.itemsize
                           + N * b.dtype.itemsize + B * N * out_sz),
    )

    return pl.pallas_call(
        kernel,
        out_shape=jax.ShapeDtypeStruct((B, N), out_dtype),
        grid_spec=pltpu.PrefetchScalarGridSpec(
            num_scalar_prefetch=0,
            grid=grid,
            in_specs=[
                pl.BlockSpec((bm, bk), lambda i, j, k: (i, k)),   # z tile
                pl.BlockSpec((bk, bn), lambda i, j, k: (k, j)),   # W tile
                pl.BlockSpec((1, bn), lambda i, j, k: (0, j)),    # bias tile
            ],
            out_specs=pl.BlockSpec((bm, bn), lambda i, j, k: (i, j)),
            scratch_shapes=scratch,
        ),
        compiler_params=pltpu.CompilerParams(
            dimension_semantics=("parallel", "parallel", "arbitrary"),
            vmem_limit_bytes=vmem_limit,
        ),
        cost_estimate=cost,
    )(zp, Wp, b2)


if __name__ == "__main__":
    key = jax.random.PRNGKey(0)
    k_w, k_b, k_z, k_z2, k_z3 = jax.random.split(key, 5)

    # --- 1) Module-default shapes (noise_dim=2, output_dim=2), small batch,
    #        exact f32 semantics (single-K fast path). -----------------------
    noise_dim, output_dim, batch = 2, 2, 8
    W = jax.random.normal(k_w, (noise_dim, output_dim), dtype=jnp.float32)
    b = 2.0 * jax.random.normal(k_b, (output_dim,), dtype=jnp.float32)
    z = jax.random.normal(k_z, (batch, noise_dim), dtype=jnp.float32)

    out = jax.block_until_ready(
        linear_generator_forward(z, W, b, compute_dtype=jnp.float32))
    ref = z @ W + b
    assert out.shape == (batch, output_dim)
    assert jnp.allclose(out, ref, atol=1e-5, rtol=1e-5), "mismatch (f32 fast path)"

    # --- 2) Larger batch / mid-size dims, default bf16 MXU path, 2 M-blocks,
    #        no wrapper pad/slice (partial boundary blocks masked by Pallas). -
    B2, D2, N2 = 300, 40, 20
    W2 = jax.random.normal(k_w, (D2, N2), dtype=jnp.float32)
    b2 = 2.0 * jax.random.normal(k_b, (N2,), dtype=jnp.float32)
    z2 = jax.random.normal(k_z2, (B2, D2), dtype=jnp.float32)

    out2 = jax.block_until_ready(linear_generator_forward(z2, W2, b2))
    ref2 = z2 @ W2 + b2
    assert out2.shape == (B2, N2)
    assert jnp.allclose(out2, ref2, atol=0.3, rtol=0.05), "mismatch (bf16 path)"

    # --- 3) K larger than the K tile: exercises K zero-pad + multi-K kernel
    #        accumulating directly into the f32 output block. ----------------
    B3, D3, N3 = 64, 300, 20
    W3 = jax.random.normal(k_w, (D3, N3), dtype=jnp.float32)
    b3 = 2.0 * jax.random.normal(k_b, (N3,), dtype=jnp.float32)
    z3 = jax.random.normal(k_z3, (B3, D3), dtype=jnp.float32)

    out3 = jax.block_until_ready(
        linear_generator_forward(z3, W3, b3, compute_dtype=jnp.float32, tk=128))
    ref3 = z3 @ W3 + b3
    assert out3.shape == (B3, N3)
    assert jnp.allclose(out3, ref3, atol=1e-4, rtol=1e-4), "mismatch (multi-K path)"

    print("KERNEL_OK")
</pallas_src>

<mosaic_0001>
module attributes {stable_mosaic.version = 11 : i64} {
  func.func @_single_k_kernel(%arg0: i32, %arg1: i32, %arg2: i32, %arg3: memref<8x2xf32, #tpu.memory_space<vmem>>, %arg4: memref<2x2xf32, #tpu.memory_space<vmem>>, %arg5: memref<1x2xf32, #tpu.memory_space<vmem>>, %arg6: memref<8x2xf32, #tpu.memory_space<vmem>>) attributes {dimension_semantics = [#tpu.dimension_semantics<parallel>, #tpu.dimension_semantics<parallel>, #tpu.dimension_semantics<arbitrary>], iteration_bounds = array<i64: 1, 1, 1>, scalar_prefetch = 0 : i64, scratch_operands = 0 : i64, tpu.core_type = #tpu.core_type<tc>, window_params = [{transform_indices = @transform_0, window_bounds = array<i64: 8, 2>}, {transform_indices = @transform_1, window_bounds = array<i64: 2, 2>}, {transform_indices = @transform_2, window_bounds = array<i64: 1, 2>}, {transform_indices = @transform_3, window_bounds = array<i64: 8, 2>}]} {
    %c0 = arith.constant 0 : index
    %c0_0 = arith.constant 0 : index
    %0 = vector.load %arg3[%c0, %c0_0] : memref<8x2xf32, #tpu.memory_space<vmem>>, vector<8x2xf32>
    %c0_1 = arith.constant 0 : index
    %c0_2 = arith.constant 0 : index
    %1 = vector.load %arg4[%c0_1, %c0_2] : memref<2x2xf32, #tpu.memory_space<vmem>>, vector<2x2xf32>
    %cst = arith.constant dense<0.000000e+00> : vector<8x2xf32>
    %2 = tpu.matmul %0, %1, %cst {dimension_numbers = #tpu.dot_dimension_numbers<[1], [0], [0], [1], [0, 0, 1, 1], [], []>} : vector<8x2xf32>, vector<2x2xf32>, vector<8x2xf32> -> vector<8x2xf32>
    %c0_3 = arith.constant 0 : index
    %c0_4 = arith.constant 0 : index
    %3 = vector.load %arg5[%c0_3, %c0_4] : memref<1x2xf32, #tpu.memory_space<vmem>>, vector<1x2xf32>
    %4 = vector.broadcast %3 : vector<1x2xf32> to vector<8x2xf32>
    %5 = arith.addf %2, %4 : vector<8x2xf32>
    %c0_5 = arith.constant 0 : index
    %c0_6 = arith.constant 0 : index
    %6 = vector.load %arg6[%c0_5, %c0_6] : memref<8x2xf32, #tpu.memory_space<vmem>>, vector<8x2xf32>
    tpu.vector_store %arg6[%c0_5, %c0_6], %5 {strides = array<i32>} : memref<8x2xf32, #tpu.memory_space<vmem>>, vector<8x2xf32>,
    return
  }
  func.func @transform_0(%arg0: i32, %arg1: i32, %arg2: i32) -> (i32, i32) {
    %c0_i32 = arith.constant 0 : i32
    return %arg0, %arg2 : i32, i32
  }
  func.func @transform_1(%arg0: i32, %arg1: i32, %arg2: i32) -> (i32, i32) {
    %c0_i32 = arith.constant 0 : i32
    return %arg2, %arg1 : i32, i32
  }
  func.func @transform_2(%arg0: i32, %arg1: i32, %arg2: i32) -> (i32, i32) {
    %c0_i32 = arith.constant 0 : i32
    %c0_i32_0 = arith.constant 0 : i32
    return %c0_i32, %arg1 : i32, i32
  }
  func.func @transform_3(%arg0: i32, %arg1: i32, %arg2: i32) -> (i32, i32) {
    %c0_i32 = arith.constant 0 : i32
    return %arg0, %arg1 : i32, i32
  }
}

</mosaic_0001>

<llo_original>
// kernel: linear_generator_forward.1
$region0: #{linear_generator_forward.1}
  #allocation0 [shape = 'u32[]', space=smem, size = 0x4, offset = 0x4, fixed_abs, tag = 'smem constant byte address 0x4 - core index']
  #allocation1 [shape = 'u32[144,128]{1,0:T(1,128)}', space=vmem, size = 0x12000, scoped, tag = 'internal scratch']
  %s0 = inlined_call_operand.vmem [shape: f32[8,2], index: 0, kind: input, shape index: {}]
  %s1 = inlined_call_operand.vmem [shape: f32[2,2], index: 1, kind: input, shape index: {}]
  %s2 = inlined_call_operand.vmem [shape: f32[1,2], index: 2, kind: input, shape index: {}]
  %s3 = inlined_call_operand.vmem [shape: f32[8,2], index: 3, kind: output, shape index: {}]
  %s4 = sld [smem:[#allocation0]]
  $region22: #{linear_generator_forward.1} parent=0
    _
  %s6 = ssub.s32 1, %s4
  %s7 = scalar_select 0, %s6, %s4
  // Predicated region
  $region2: #{linear_generator_forward.1} parent=0 // pred_check
    _
  $region3: #{linear_generator_forward.1} parent=0 // pred_check_branch
    %9 = sbr.rel (0) target = $region5
  $region4: #{linear_generator_forward.1} parent=0 // pred_region
    _
  $region5: #{linear_generator_forward.1} parent=0 // pred_fallthru
    _
  // Predicated region
  $region6: #{linear_generator_forward.1} parent=0 // pred_check
    _
  $region7: #{linear_generator_forward.1} parent=0 // pred_check_branch
    %11 = sbr.rel (0) target = $region9
  $region8: #{linear_generator_forward.1} parent=0 // pred_region
    _
  $region9: #{linear_generator_forward.1} parent=0 // pred_fallthru
    _
  // Predicated region
  $region10: #{linear_generator_forward.1} parent=0 // pred_check
    _
  $region11: #{linear_generator_forward.1} parent=0 // pred_check_branch
    %13 = sbr.rel (0) target = $region13
  $region12: #{linear_generator_forward.1} parent=0 // pred_region
    _
  $region13: #{linear_generator_forward.1} parent=0 // pred_fallthru
    _
  %v14 = vld [vmem:[%s0] sm:$0xff]
  %v15 = vld [vmem:[%s1] sm:$0x3]
  %v16 = vld [vmem:[%s2] sm:$0x1]
  %v18 = vlaneseq
  %v19 = vshrl.u32 %v18, 7
  %v20 = vsub.s32 0, %v19
  %v21 = vrot.slane %v16, %v20
  %vm23 = vcmask 15360
  %v25 = vsel %vm23, %v14, 0
  %vm27 = vcmask 1041408
  %v29 = vsel %vm27, %v15, 0
  %31 = vmatprep.subr.mxu0 0.0
  %32 = vmatpush1.msra.mxu0 0.0
  %33 = vmatprep.subr.mxu0 0.0
  %34 = vmatpush1.msra.mxu0 0.0
  %35 = vmatprep.subr.mxu0 0.0
  %36 = vmatpush1.msra.mxu0 0.0
  %37 = vmatprep.subr.mxu0 0.0
  %38 = vmatpush1.msra.mxu0 0.0
  %39 = vmatprep.subr.mxu0 0.0
  %40 = vmatpush1.msra.mxu0 0.0
  %41 = vmatprep.subr.mxu0 0.0
  %42 = vmatpush1.msra.mxu0 0.0
  %43 = vmatprep.subr.mxu0 0.0
  %44 = vmatpush1.msra.mxu0 0.0
  %45 = vmatprep.subr.mxu0 0.0
  %46 = vmatpush1.msra.mxu0 0.0
  %47 = vmatprep.subr.mxu0 0.0
  %48 = vmatpush1.msra.mxu0 0.0
  %49 = vmatprep.subr.mxu0 0.0
  %50 = vmatpush1.msra.mxu0 0.0
  %51 = vmatprep.subr.mxu0 0.0
  %52 = vmatpush1.msra.mxu0 0.0
  %53 = vmatprep.subr.mxu0 0.0
  %54 = vmatpush1.msra.mxu0 0.0
  %55 = vmatprep.subr.mxu0 0.0
  %56 = vmatpush1.msra.mxu0 0.0
  %57 = vmatprep.subr.mxu0 0.0
  %58 = vmatpush1.msra.mxu0 0.0
  %59 = vmatprep.subr.mxu0 0.0
  %60 = vmatpush1.msra.mxu0 0.0
  %61 = vmatprep.subr.mxu0 0.0
  %62 = vmatpush1.msra.mxu0 %v29
  %63 = vmatprep.subr.mxu0 0.0
  %64 = vmatpush2.msra.mxu0 0.0
  %65 = vmatprep.subr.mxu0 0.0
  %66 = vmatpush2.msra.mxu0 0.0
  %67 = vmatprep.subr.mxu0 0.0
  %68 = vmatpush2.msra.mxu0 0.0
  %69 = vmatprep.subr.mxu0 0.0
  %70 = vmatpush2.msra.mxu0 0.0
  %71 = vmatprep.subr.mxu0 0.0
  %72 = vmatpush2.msra.mxu0 0.0
  %73 = vmatprep.subr.mxu0 0.0
  %74 = vmatpush2.msra.mxu0 0.0
  %75 = vmatprep.subr.mxu0 0.0
  %76 = vmatpush2.msra.mxu0 0.0
  %77 = vmatprep.subr.mxu0 0.0
  %78 = vmatpush2.msra.mxu0 0.0
  %79 = vmatprep.subr.mxu0 0.0
  %80 = vmatpush2.msra.mxu0 0.0
  %81 = vmatprep.subr.mxu0 0.0
  %82 = vmatpush2.msra.mxu0 0.0
  %83 = vmatprep.subr.mxu0 0.0
  %84 = vmatpush2.msra.mxu0 0.0
  %85 = vmatprep.subr.mxu0 0.0
  %86 = vmatpush2.msra.mxu0 0.0
  %87 = vmatprep.subr.mxu0 0.0
  %88 = vmatpush2.msra.mxu0 0.0
  %89 = vmatprep.subr.mxu0 0.0
  %90 = vmatpush2.msra.mxu0 0.0
  %91 = vmatprep.subr.mxu0 0.0
  %92 = vmatpush2.msra.mxu0 0.0
  %93 = vmatprep.subr.mxu0 0.0
  %94 = vmatpush2.msra.mxu0 0.0
  %95 = vmatprep.mubr.f32.mxu0 0.0
  %96 = vmatmul.mubr.f32.gmra.mxu0 %v25
  %v97 = vpop.f32.mrf.mxu0
  %v98 = vadd.f32 %v21, %v97
  %v99 = vpop.f32.mrf.mxu0
  %100 = vdwg.mxu0
  %101 = vst.msk [vmem:[%s3] sm:$0xff] %vm23, %v98
  // Predicated region
  $region14: #{linear_generator_forward.1} parent=0 // pred_check
    _
  $region15: #{linear_generator_forward.1} parent=0 // pred_check_branch
    %103 = sbr.rel (0) target = $region17
  $region16: #{linear_generator_forward.1} parent=0 // pred_region
    _
  $region17: #{linear_generator_forward.1} parent=0 // pred_fallthru
    _
  // Predicated region
  $region18: #{linear_generator_forward.1} parent=0 // pred_check
    _
  $region19: #{linear_generator_forward.1} parent=0 // pred_check_branch
    %105 = sbr.rel (0) target = $region21
  $region20: #{linear_generator_forward.1} parent=0 // pred_region
    _
  $region21: #{linear_generator_forward.1} parent=0 // pred_fallthru
    _

</llo_original>
